<compile_context>
chip_gen: v7x
topology: tpu7x:2x2x1
jax: 0.10.0
libtpu: 0.0.40
codegen_flags: <defaults>
</compile_context>

<pallas_src>
import functools
from typing import Any, NamedTuple

import jax
import jax.numpy as jnp
from jax.experimental import pallas as pl
from jax.experimental.pallas import tpu as pltpu

LANE = 128     # TPU vreg lane width
SUBLANE = 8    # second-to-last block dim alignment


def _round_up(n: int, m: int) -> int:
    return ((n + m - 1) // m) * m


def _pad_target(n: int) -> int:
    """Lane-pad a feature dim: 128-aligned, upgraded to 256 when nearly free (256x256 MXU)."""
    p128 = _round_up(n, LANE)
    p256 = _round_up(n, 2 * LANE)
    return p256 if (n >= 4 * LANE and (p256 - n) <= n // 16) else p128


# ---------------------------------------------------------------------------
# Kernel
# ---------------------------------------------------------------------------
def mlp_kernel(x_ref, w1_ref, b1_ref, w2_ref, b2_ref, w3_ref, b3_ref, o_ref):
    """One batch tile: Linear -> ReLU -> Linear -> ReLU -> Linear.

    Matmuls run on the MXU in the weights' compute dtype (bf16 by default) with f32
    accumulation; bias add / ReLU in f32. x is cast in-kernel (free VPU work under MXU).
    """
    cdt = w1_ref.dtype
    x = x_ref[...].astype(cdt)
    h1 = jnp.dot(x, w1_ref[...], preferred_element_type=jnp.float32)
    h1 = jnp.maximum(h1 + b1_ref[...], 0.0).astype(cdt)
    h2 = jnp.dot(h1, w2_ref[...], preferred_element_type=jnp.float32)
    h2 = jnp.maximum(h2 + b2_ref[...], 0.0).astype(cdt)
    out = jnp.dot(h2, w3_ref[...], preferred_element_type=jnp.float32) + b3_ref[...]
    o_ref[...] = out.astype(o_ref.dtype)


# ---------------------------------------------------------------------------
# Chip / capability queries (trace-time only)
# ---------------------------------------------------------------------------
@functools.lru_cache(maxsize=1)
def _tpu_env():
    """Returns (vmem_capacity_bytes, tensorcores_per_device, device_kind_lower)."""
    vmem_cap = None
    try:
        info = pltpu.get_tpu_info()
        vmem_cap = int(getattr(info, "vmem_capacity_bytes", 0)) or None
    except Exception:
        pass
    kind = ""
    num_cores = 1
    try:
        d = jax.devices()[0]
        kind = (d.device_kind or "").lower()
        num_cores = int(getattr(d, "num_cores", 0) or 0)
        if num_cores <= 0:
            # v4 / v5p / v7x present 2 TensorCores per device (megacore).
            num_cores = 2 if any(t in kind for t in ("v4", "v5p", "v7")) else 1
        if vmem_cap is None:
            vmem_cap = (64 << 20) if "v7" in kind else (128 << 20)
    except Exception:
        pass
    if vmem_cap is None:
        vmem_cap = 64 << 20
    return vmem_cap, max(1, num_cores), kind


@functools.lru_cache(maxsize=1)
def _buffered_ok() -> bool:
    """Trace-time capability probe for pipeline_mode=pl.Buffered (no execution)."""
    try:
        def _probe(x_ref, o_ref):
            o_ref[...] = x_ref[...]
        fn = pl.pallas_call(
            _probe,
            out_shape=jax.ShapeDtypeStruct((8, 128), jnp.float32),
            grid=(1,),
            in_specs=[pl.BlockSpec((8, 128), lambda i: (0, 0),
                                   pipeline_mode=pl.Buffered(1))],
            out_specs=pl.BlockSpec((8, 128), lambda i: (0, 0)),
        )
        jax.jit(fn).lower(jax.ShapeDtypeStruct((8, 128), jnp.float32))
        return True
    except Exception:
        return False


# ---------------------------------------------------------------------------
# Parameter preparation (hoisted out of the per-call path)
# ---------------------------------------------------------------------------
class PreparedParams(NamedTuple):
    w1: Any
    b1: Any
    w2: Any
    b2: Any
    w3: Any
    b3: Any
    in_dim: int
    in_p: int
    hid_p: int
    out_dim: int
    out_p: int


def prepare_params(params, *, compute_dtype=jnp.bfloat16) -> PreparedParams:
    """Pad + cast weights ONCE. Zero padding is exact for Linear+ReLU chains."""
    w1, b1, w2, b2, w3, b3 = params
    in_dim, hid = w1.shape
    out_dim = w3.shape[1]
    # Pad K only when large enough that lane-dense x DMA pays for the extra HBM bytes.
    in_p = _round_up(in_dim, LANE) if in_dim >= LANE else in_dim
    hid_p = _pad_target(hid)
    out_p = _pad_target(out_dim)

    def pad2(a, rows, cols, dt):
        a = a.astype(dt)
        if a.shape == (rows, cols):
            return a
        return jnp.pad(a, ((0, rows - a.shape[0]), (0, cols - a.shape[1])))

    return PreparedParams(
        w1=pad2(w1, in_p, hid_p, compute_dtype),
        b1=pad2(b1.reshape(1, -1), 1, hid_p, jnp.float32),
        w2=pad2(w2, hid_p, hid_p, compute_dtype),
        b2=pad2(b2.reshape(1, -1), 1, hid_p, jnp.float32),
        w3=pad2(w3, hid_p, out_p, compute_dtype),
        b3=pad2(b3.reshape(1, -1), 1, out_p, jnp.float32),
        in_dim=in_dim, in_p=in_p, hid_p=hid_p, out_dim=out_dim, out_p=out_p)


# ---------------------------------------------------------------------------
# VMEM budget + batch tile selection
# ---------------------------------------------------------------------------
def _vmem_budget_and_tile(B, p: PreparedParams, x_itemsize, out_itemsize, tb_req):
    vmem_cap, num_cores, kind = _tpu_env()
    buffered = _buffered_ok()
    cbytes = jnp.dtype(p.w1.dtype).itemsize

    weight_buf = 1 if buffered else 2  # without Buffered(1), resident blocks are double-buffered
    weight_bytes = weight_buf * (
        (p.in_p * p.hid_p + p.hid_p * p.hid_p + p.hid_p * p.out_p) * cbytes
        + (2 * p.hid_p + p.out_p) * 4)

    # Extra x buffering only helps on low-bandwidth v5e for thin MLPs.
    x_buffers = 3 if (buffered and "v5" in kind and "v5p" not in kind and p.hid_p <= 512) else 2

    per_row = (x_buffers * p.in_p * x_itemsize            # x tiles (original dtype, cast in-kernel)
               + 2 * p.out_p * out_itemsize               # out tiles (double-buffered)
               + 3 * p.hid_p * 4 + 2 * p.hid_p * cbytes   # h1/h2 f32 + compute-dtype copies
               + p.out_p * 4)                             # f32 result before the final cast

    budget = int(vmem_cap * 0.85)
    avail = budget - weight_bytes
    tb_max = (avail // per_row) if avail > 0 else 0
    tb_max = (tb_max // SUBLANE) * SUBLANE
    if tb_max < SUBLANE:
        return None  # resident-weight design does not fit this chip's VMEM

    if tb_req is not None:
        tb = tb_req
    else:
        tb = 512
        if num_cores > 1 and B > SUBLANE:
            # >=2 grid steps per TensorCore (restores DMA/compute overlap per core),
            # split evenly to avoid a near-empty tail tile serializing one core.
            steps = max(2 * num_cores, pl.cdiv(B, 512))
            tb = pl.cdiv(B, steps)
    tb = min(tb, tb_max, B)
    if tb < B and tb % SUBLANE:
        tb = max(SUBLANE, (tb // SUBLANE) * SUBLANE)  # round down -> stays within budget

    footprint = weight_bytes + tb * per_row
    vmem_limit = int(min(vmem_cap, max(footprint + (4 << 20), 32 << 20)))
    return tb, vmem_limit, buffered, x_buffers


# ---------------------------------------------------------------------------
# Forward
# ---------------------------------------------------------------------------
def network_forward(x, params, *, tb=None, compute_dtype=jnp.bfloat16):
    """Fused 3-layer MLP forward; matches PyTorch NETWORK.forward (any leading dims)."""
    if not isinstance(params, PreparedParams):
        # One-off pad/cast; for repeated calls, call prepare_params() once and reuse.
        params = prepare_params(params, compute_dtype=compute_dtype)
    p = params

    lead = x.shape[:-1]
    x2 = x.reshape(-1, x.shape[-1])
    B = x2.shape[0]
    assert x2.shape[1] == p.in_dim, (x2.shape, p.in_dim)
    if p.in_p != p.in_dim:
        x2 = jnp.pad(x2, ((0, 0), (0, p.in_p - p.in_dim)))
    out_dtype = x.dtype

    cfg = _vmem_budget_and_tile(B, p, jnp.dtype(x2.dtype).itemsize,
                                jnp.dtype(out_dtype).itemsize, tb)
    if cfg is None:
        # TODO(synk): stream W2 over K-blocks (extra "arbitrary" grid axis + f32 VMEM
        # accumulator) when resident weights exceed the VMEM budget; for now fall back
        # to plain XLA at very large hidden dims.
        h1 = jnp.maximum(jnp.dot(x2, p.w1.astype(jnp.float32)) + p.b1, 0.0)
        h2 = jnp.maximum(jnp.dot(h1, p.w2.astype(jnp.float32)) + p.b2, 0.0)
        out = (jnp.dot(h2, p.w3.astype(jnp.float32)) + p.b3).astype(out_dtype)
        return out[:, :p.out_dim].reshape(*lead, p.out_dim)

    tb_, vmem_limit, buffered, x_buffers = cfg
    grid = (pl.cdiv(B, tb_),)

    cbytes = jnp.dtype(p.w1.dtype).itemsize
    flops = 2 * B * (p.in_p * p.hid_p + p.hid_p * p.hid_p + p.hid_p * p.out_p)
    bytes_accessed = (
        B * p.in_p * jnp.dtype(x2.dtype).itemsize
        + (p.in_p * p.hid_p + p.hid_p * p.hid_p + p.hid_p * p.out_p) * cbytes
        + (2 * p.hid_p + p.out_p) * 4
        + B * p.out_p * jnp.dtype(out_dtype).itemsize)

    def wspec(shape):
        if buffered:
            # Constant block index -> resident block; one VMEM buffer suffices.
            return pl.BlockSpec(shape, lambda i: (0, 0), pipeline_mode=pl.Buffered(1))
        return pl.BlockSpec(shape, lambda i: (0, 0))

    if buffered and x_buffers != 2:
        x_spec = pl.BlockSpec((tb_, p.in_p), lambda i: (i, 0),
                              pipeline_mode=pl.Buffered(x_buffers))
    else:
        x_spec = pl.BlockSpec((tb_, p.in_p), lambda i: (i, 0))

    out_padded = pl.pallas_call(
        mlp_kernel,
        out_shape=jax.ShapeDtypeStruct((B, p.out_p), out_dtype),
        grid_spec=pltpu.PrefetchScalarGridSpec(
            num_scalar_prefetch=0,
            grid=grid,
            in_specs=[
                x_spec,                          # x batch tile
                wspec((p.in_p, p.hid_p)),        # w1
                wspec((1, p.hid_p)),             # b1
                wspec((p.hid_p, p.hid_p)),       # w2
                wspec((1, p.hid_p)),             # b2
                wspec((p.hid_p, p.out_p)),       # w3
                wspec((1, p.out_p)),             # b3
            ],
            out_specs=pl.BlockSpec((tb_, p.out_p), lambda i: (i, 0)),
        ),
        compiler_params=pltpu.CompilerParams(
            dimension_semantics=("parallel",),
            vmem_limit_bytes=vmem_limit,
        ),
        cost_estimate=pl.CostEstimate(
            flops=flops, transcendentals=0, bytes_accessed=bytes_accessed),
    )(x2, p.w1, p.b1, p.w2, p.b2, p.w3, p.b3)

    out = out_padded if p.out_p == p.out_dim else out_padded[:, :p.out_dim]
    return out.reshape(*lead, p.out_dim)


# ---------------------------------------------------------------------------
# Reference / init / test
# ---------------------------------------------------------------------------
def init_params(key, input_dim, output_dim, hidden_dim, dtype=jnp.float32):
    """Deterministic synthetic parameters (PyTorch Linear init, pre-transposed)."""
    ks = jax.random.split(key, 6)

    def lin(kw, kb, fan_in, fan_out):
        bound = 1.0 / jnp.sqrt(fan_in)
        w = jax.random.uniform(kw, (fan_in, fan_out), dtype, -bound, bound)
        b = jax.random.uniform(kb, (1, fan_out), dtype, -bound, bound)
        return w, b

    w1, b1 = lin(ks[0], ks[1], input_dim, hidden_dim)
    w2, b2 = lin(ks[2], ks[3], hidden_dim, hidden_dim)
    w3, b3 = lin(ks[4], ks[5], hidden_dim, output_dim)
    return (w1, b1, w2, b2, w3, b3)


def network_ref(x, params):
    w1, b1, w2, b2, w3, b3 = params
    h1 = jnp.maximum(x @ w1 + b1, 0.0)
    h2 = jnp.maximum(h1 @ w2 + b2, 0.0)
    return h2 @ w3 + b3


if __name__ == "__main__":
    key = jax.random.PRNGKey(0)
    kx, kp, kx2, kp2 = jax.random.split(key, 4)

    # Small config consistent with the PyTorch module.
    B, input_dim, hidden_dim, output_dim = 8, 16, 32, 8
    x = jax.random.normal(kx, (B, input_dim), jnp.float32)
    params = init_params(kp, input_dim, output_dim, hidden_dim)
    ref = network_ref(x, params)

    # f32 compute path: tight numerics baseline vs. the pure-JAX reference.
    prep_f32 = prepare_params(params, compute_dtype=jnp.float32)
    out_f32 = jax.block_until_ready(network_forward(x, prep_f32))
    assert out_f32.shape == (B, output_dim)
    assert jnp.allclose(out_f32, ref, atol=1e-5, rtol=1e-5)

    # Default bf16 compute path (f32 accumulation): deliberate speed/precision tradeoff.
    prep_bf16 = prepare_params(params, compute_dtype=jnp.bfloat16)
    out_bf16 = jax.block_until_ready(network_forward(x, prep_bf16))
    assert out_bf16.shape == (B, output_dim)
    assert jnp.allclose(out_bf16, ref, atol=5e-2, rtol=5e-2)

    # Second config exercising K-padding (160->256), lane padding, and a multi-step
    # grid with a partial last batch tile.
    B2, in2, hid2, out2 = 600, 160, 96, 40
    x2 = jax.random.normal(kx2, (B2, in2), jnp.float32)
    params2 = init_params(kp2, in2, out2, hid2)
    ref2 = network_ref(x2, params2)
    prep2 = prepare_params(params2, compute_dtype=jnp.float32)
    out2v = jax.block_until_ready(network_forward(x2, prep2))
    assert out2v.shape == (B2, out2)
    assert jnp.allclose(out2v, ref2, atol=1e-3, rtol=1e-3)

    print("KERNEL_OK")
</pallas_src>

<mosaic_0001>
module attributes {stable_mosaic.version = 11 : i64} {
  func.func @mlp_kernel(%arg0: i32, %arg1: memref<8x16xf32, #tpu.memory_space<vmem>>, %arg2: memref<16x128xf32, #tpu.memory_space<vmem>>, %arg3: memref<1x128xf32, #tpu.memory_space<vmem>>, %arg4: memref<128x128xf32, #tpu.memory_space<vmem>>, %arg5: memref<1x128xf32, #tpu.memory_space<vmem>>, %arg6: memref<128x128xf32, #tpu.memory_space<vmem>>, %arg7: memref<1x128xf32, #tpu.memory_space<vmem>>, %arg8: memref<8x128xf32, #tpu.memory_space<vmem>>) attributes {dimension_semantics = [#tpu.dimension_semantics<parallel>], iteration_bounds = array<i64: 1>, scalar_prefetch = 0 : i64, scratch_operands = 0 : i64, tpu.core_type = #tpu.core_type<tc>, window_params = [{transform_indices = @transform_0, window_bounds = array<i64: 8, 16>}, {pipeline_mode = #tpu.pipeline_mode<synchronous>, transform_indices = @transform_1, window_bounds = array<i64: 16, 128>}, {pipeline_mode = #tpu.pipeline_mode<synchronous>, transform_indices = @transform_2, window_bounds = array<i64: 1, 128>}, {pipeline_mode = #tpu.pipeline_mode<synchronous>, transform_indices = @transform_3, window_bounds = array<i64: 128, 128>}, {pipeline_mode = #tpu.pipeline_mode<synchronous>, transform_indices = @transform_4, window_bounds = array<i64: 1, 128>}, {pipeline_mode = #tpu.pipeline_mode<synchronous>, transform_indices = @transform_5, window_bounds = array<i64: 128, 128>}, {pipeline_mode = #tpu.pipeline_mode<synchronous>, transform_indices = @transform_6, window_bounds = array<i64: 1, 128>}, {transform_indices = @transform_7, window_bounds = array<i64: 8, 128>}]} {
    %c0 = arith.constant 0 : index
    %c0_0 = arith.constant 0 : index
    %0 = vector.load %arg1[%c0, %c0_0] : memref<8x16xf32, #tpu.memory_space<vmem>>, vector<8x16xf32>
    %c0_1 = arith.constant 0 : index
    %c0_2 = arith.constant 0 : index
    %1 = vector.load %arg2[%c0_1, %c0_2] : memref<16x128xf32, #tpu.memory_space<vmem>>, vector<16x128xf32>
    %cst = arith.constant dense<0.000000e+00> : vector<8x128xf32>
    %2 = tpu.matmul %0, %1, %cst {dimension_numbers = #tpu.dot_dimension_numbers<[1], [0], [0], [1], [0, 0, 1, 1], [], []>} : vector<8x16xf32>, vector<16x128xf32>, vector<8x128xf32> -> vector<8x128xf32>
    %c0_3 = arith.constant 0 : index
    %c0_4 = arith.constant 0 : index
    %3 = vector.load %arg3[%c0_3, %c0_4] : memref<1x128xf32, #tpu.memory_space<vmem>>, vector<1x128xf32>
    %4 = vector.broadcast %3 : vector<1x128xf32> to vector<8x128xf32>
    %5 = arith.addf %2, %4 : vector<8x128xf32>
    %cst_5 = arith.constant 0.000000e+00 : f32
    %6 = vector.broadcast %cst_5 : f32 to vector<8x128xf32>
    %7 = arith.maximumf %5, %6 : vector<8x128xf32>
    %c0_6 = arith.constant 0 : index
    %c0_7 = arith.constant 0 : index
    %8 = vector.load %arg4[%c0_6, %c0_7] : memref<128x128xf32, #tpu.memory_space<vmem>>, vector<128x128xf32>
    %cst_8 = arith.constant dense<0.000000e+00> : vector<8x128xf32>
    %9 = tpu.matmul %7, %8, %cst_8 {dimension_numbers = #tpu.dot_dimension_numbers<[1], [0], [0], [1], [0, 0, 1, 1], [], []>} : vector<8x128xf32>, vector<128x128xf32>, vector<8x128xf32> -> vector<8x128xf32>
    %c0_9 = arith.constant 0 : index
    %c0_10 = arith.constant 0 : index
    %10 = vector.load %arg5[%c0_9, %c0_10] : memref<1x128xf32, #tpu.memory_space<vmem>>, vector<1x128xf32>
    %11 = vector.broadcast %10 : vector<1x128xf32> to vector<8x128xf32>
    %12 = arith.addf %9, %11 : vector<8x128xf32>
    %cst_11 = arith.constant 0.000000e+00 : f32
    %13 = vector.broadcast %cst_11 : f32 to vector<8x128xf32>
    %14 = arith.maximumf %12, %13 : vector<8x128xf32>
    %c0_12 = arith.constant 0 : index
    %c0_13 = arith.constant 0 : index
    %15 = vector.load %arg6[%c0_12, %c0_13] : memref<128x128xf32, #tpu.memory_space<vmem>>, vector<128x128xf32>
    %cst_14 = arith.constant dense<0.000000e+00> : vector<8x128xf32>
    %16 = tpu.matmul %14, %15, %cst_14 {dimension_numbers = #tpu.dot_dimension_numbers<[1], [0], [0], [1], [0, 0, 1, 1], [], []>} : vector<8x128xf32>, vector<128x128xf32>, vector<8x128xf32> -> vector<8x128xf32>
    %c0_15 = arith.constant 0 : index
    %c0_16 = arith.constant 0 : index
    %17 = vector.load %arg7[%c0_15, %c0_16] : memref<1x128xf32, #tpu.memory_space<vmem>>, vector<1x128xf32>
    %18 = vector.broadcast %17 : vector<1x128xf32> to vector<8x128xf32>
    %19 = arith.addf %16, %18 : vector<8x128xf32>
    %c0_17 = arith.constant 0 : index
    %c0_18 = arith.constant 0 : index
    %20 = vector.load %arg8[%c0_17, %c0_18] : memref<8x128xf32, #tpu.memory_space<vmem>>, vector<8x128xf32>
    tpu.vector_store %arg8[%c0_17, %c0_18], %19 {strides = array<i32>} : memref<8x128xf32, #tpu.memory_space<vmem>>, vector<8x128xf32>,
    return
  }
  func.func @transform_0(%arg0: i32) -> (i32, i32) {
    %c0_i32 = arith.constant 0 : i32
    %c0_i32_0 = arith.constant 0 : i32
    return %arg0, %c0_i32 : i32, i32
  }
  func.func @transform_1(%arg0: i32) -> (i32, i32) {
    %c0_i32 = arith.constant 0 : i32
    %c0_i32_0 = arith.constant 0 : i32
    %c0_i32_1 = arith.constant 0 : i32
    return %c0_i32, %c0_i32_0 : i32, i32
  }
  func.func @transform_2(%arg0: i32) -> (i32, i32) {
    %c0_i32 = arith.constant 0 : i32
    %c0_i32_0 = arith.constant 0 : i32
    %c0_i32_1 = arith.constant 0 : i32
    return %c0_i32, %c0_i32_0 : i32, i32
  }
  func.func @transform_3(%arg0: i32) -> (i32, i32) {
    %c0_i32 = arith.constant 0 : i32
    %c0_i32_0 = arith.constant 0 : i32
    %c0_i32_1 = arith.constant 0 : i32
    return %c0_i32, %c0_i32_0 : i32, i32
  }
  func.func @transform_4(%arg0: i32) -> (i32, i32) {
    %c0_i32 = arith.constant 0 : i32
    %c0_i32_0 = arith.constant 0 : i32
    %c0_i32_1 = arith.constant 0 : i32
    return %c0_i32, %c0_i32_0 : i32, i32
  }
  func.func @transform_5(%arg0: i32) -> (i32, i32) {
    %c0_i32 = arith.constant 0 : i32
    %c0_i32_0 = arith.constant 0 : i32
    %c0_i32_1 = arith.constant 0 : i32
    return %c0_i32, %c0_i32_0 : i32, i32
  }
  func.func @transform_6(%arg0: i32) -> (i32, i32) {
    %c0_i32 = arith.constant 0 : i32
    %c0_i32_0 = arith.constant 0 : i32
    %c0_i32_1 = arith.constant 0 : i32
    return %c0_i32, %c0_i32_0 : i32, i32
  }
  func.func @transform_7(%arg0: i32) -> (i32, i32) {
    %c0_i32 = arith.constant 0 : i32
    %c0_i32_0 = arith.constant 0 : i32
    return %arg0, %c0_i32 : i32, i32
  }
}

</mosaic_0001>

<llo_original>
// kernel: tpu_custom_call.1
$region0: #{tpu_custom_call.1}
  #allocation0 [shape = 'u32[]', space=smem, size = 0x4, offset = 0x4, fixed_abs, tag = 'smem constant byte address 0x4 - core index']
  #allocation1 [shape = 'u32[144,128]{1,0:T(1,128)}', space=vmem, size = 0x12000, scoped, tag = 'internal scratch']
  %s0 = inlined_call_operand.hbm [shape: f32[8,16], index: 0, kind: input, shape index: {}]
  %s1 = inlined_call_operand.hbm [shape: f32[16,128], index: 1, kind: input, shape index: {}]
  %s2 = inlined_call_operand.vmem [shape: f32[1,128], index: 2, kind: input, shape index: {}]
  %s3 = inlined_call_operand.hbm [shape: f32[128,128], index: 3, kind: input, shape index: {}]
  %s4 = inlined_call_operand.vmem [shape: f32[1,128], index: 4, kind: input, shape index: {}]
  %s5 = inlined_call_operand.hbm [shape: f32[128,128], index: 5, kind: input, shape index: {}]
  %s6 = inlined_call_operand.vmem [shape: f32[1,128], index: 6, kind: input, shape index: {}]
  %s7 = inlined_call_operand.hbm [shape: f32[8,128], index: 7, kind: output, shape index: {}]
  %s8 = sld [smem:[#allocation0]]
  $region54: #{tpu_custom_call.1} parent=0
    _
  %s10 = ssub.s32 1, %s8
  %s11 = scalar_select 0, %s10, %s8
  $region1: #{tpu_custom_call.1} parent=0
    #allocation2 [shape = 'u8[4096]{0}', space=vmem, size = 0x1000, scoped, tag = 'input window, operand 0, single buffered']
    #allocation3 [shape = 's32[1]{0}', space=sflag, size = 0x4, scoped, tag = 'scoped memory for tpu_custom_call.1']
    #allocation4 [shape = 's32[1]{0}', space=sflag, size = 0x4, scoped, tag = 'scoped memory for tpu_custom_call.1']
    #allocation5 [shape = 'u8[8192]{0}', space=vmem, size = 0x2000, scoped, tag = 'input window, operand 1, single buffered']
    #allocation6 [shape = 's32[1]{0}', space=sflag, size = 0x4, scoped, tag = 'scoped memory for tpu_custom_call.1']
    #allocation7 [shape = 'u8[65536]{0}', space=vmem, size = 0x10000, scoped, tag = 'input window, operand 3, single buffered']
    #allocation8 [shape = 'u8[65536]{0}', space=vmem, size = 0x10000, scoped, tag = 'input window, operand 5, single buffered']
    #allocation9 [shape = 's32[1]{0}', space=sflag, size = 0x4, scoped, tag = 'scoped memory for tpu_custom_call.1']
    #allocation10 [shape = 'u8[4096]{0}', space=vmem, size = 0x1000, scoped, tag = 'output window, operand 0, single buffered']
    %12 = vsyncpa [#allocation3], 0
    %13 = vsyncpa [#allocation6], 0
    %14 = vsyncpa [#allocation9], 0
    %15 = vsyncpa [#allocation4], 0
    // Predicated region
    $region2: #{tpu_custom_call.1} parent=1 // pred_check
      _
    $region3: #{tpu_custom_call.1} parent=1 // pred_check_branch
      %17 = sbr.rel (0) target = $region5
    $region4: #{tpu_custom_call.1} parent=1 // pred_region
      %s19 = ssub.s32 128, 128
      %20 = vsyncadd [#allocation3], %s19
      %s22 = sshll.u32 [#allocation2], 4
      %s23 = int_to_ptr.vmem [resolvable:$true] %s22
      %25 = dma.hbm_to_vmem [thread:$0]  %s0, 128, %s23, [#allocation3]
    $region5: #{tpu_custom_call.1} parent=1 // pred_fallthru
      _
    // Predicated region
    $region6: #{tpu_custom_call.1} parent=1 // pred_check
      _
    $region7: #{tpu_custom_call.1} parent=1 // pred_check_branch
      %27 = sbr.rel (0) target = $region9
    $region8: #{tpu_custom_call.1} parent=1 // pred_region
      %s29 = ssub.s32 256, 256
      %30 = vsyncadd [#allocation6], %s29
      %s31 = sshll.u32 [#allocation5], 4
      %s32 = int_to_ptr.vmem [resolvable:$true] %s31
      %37 = dma.hbm_to_vmem [thread:$0]  %s1, 256, %s32, [#allocation6], 128, 128, 8
    $region9: #{tpu_custom_call.1} parent=1 // pred_fallthru
      _
    // Predicated region
    $region10: #{tpu_custom_call.1} parent=1 // pred_check
      _
    $region11: #{tpu_custom_call.1} parent=1 // pred_check_branch
      %39 = sbr.rel (0) target = $region13
    $region12: #{tpu_custom_call.1} parent=1 // pred_region
      _
    $region13: #{tpu_custom_call.1} parent=1 // pred_fallthru
      _
    // Predicated region
    $region14: #{tpu_custom_call.1} parent=1 // pred_check
      _
    $region15: #{tpu_custom_call.1} parent=1 // pred_check_branch
      %41 = sbr.rel (0) target = $region17
    $region16: #{tpu_custom_call.1} parent=1 // pred_region
      %s43 = ssub.s32 2048, 2048
      %44 = vsyncadd [#allocation6], %s43
      %s45 = sshll.u32 [#allocation7], 4
      %s46 = int_to_ptr.vmem [resolvable:$true] %s45
      %51 = dma.hbm_to_vmem [thread:$0]  %s3, 2048, %s46, [#allocation6], 128, 128, 8
    $region17: #{tpu_custom_call.1} parent=1 // pred_fallthru
      _
    // Predicated region
    $region18: #{tpu_custom_call.1} parent=1 // pred_check
      _
    $region19: #{tpu_custom_call.1} parent=1 // pred_check_branch
      %53 = sbr.rel (0) target = $region21
    $region20: #{tpu_custom_call.1} parent=1 // pred_region
      _
    $region21: #{tpu_custom_call.1} parent=1 // pred_fallthru
      _
    // Predicated region
    $region22: #{tpu_custom_call.1} parent=1 // pred_check
      _
    $region23: #{tpu_custom_call.1} parent=1 // pred_check_branch
      %55 = sbr.rel (0) target = $region25
    $region24: #{tpu_custom_call.1} parent=1 // pred_region
      %s57 = ssub.s32 2048, 2048
      %58 = vsyncadd [#allocation9], %s57
      %s59 = sshll.u32 [#allocation8], 4
      %s60 = int_to_ptr.vmem [resolvable:$true] %s59
      %65 = dma.hbm_to_vmem [thread:$0]  %s5, 2048, %s60, [#allocation9], 128, 128, 8
    $region25: #{tpu_custom_call.1} parent=1 // pred_fallthru
      _
    // Predicated region
    $region26: #{tpu_custom_call.1} parent=1 // pred_check
      _
    $region27: #{tpu_custom_call.1} parent=1 // pred_check_branch
      %67 = sbr.rel (0) target = $region29
    $region28: #{tpu_custom_call.1} parent=1 // pred_region
      _
    $region29: #{tpu_custom_call.1} parent=1 // pred_fallthru
      _
    // Predicated region
    $region30: #{tpu_custom_call.1} parent=1 // pred_check
      _
    $region31: #{tpu_custom_call.1} parent=1 // pred_check_branch
      %69 = sbr.rel (0) target = $region33
    $region32: #{tpu_custom_call.1} parent=1 // pred_region
      %70 = dma.done [#allocation3], 128
    $region33: #{tpu_custom_call.1} parent=1 // pred_fallthru
      _
    // Predicated region
    $region34: #{tpu_custom_call.1} parent=1 // pred_check
      _
    $region35: #{tpu_custom_call.1} parent=1 // pred_check_branch
      %72 = sbr.rel (0) target = $region37
    $region36: #{tpu_custom_call.1} parent=1 // pred_region
      %73 = dma.done [#allocation6], 256
    $region37: #{tpu_custom_call.1} parent=1 // pred_fallthru
      _
    // Predicated region
    $region38: #{tpu_custom_call.1} parent=1 // pred_check
      _
    $region39: #{tpu_custom_call.1} parent=1 // pred_check_branch
      %75 = sbr.rel (0) target = $region41
    $region40: #{tpu_custom_call.1} parent=1 // pred_region
      %76 = dma.done [#allocation6], 2048
    $region41: #{tpu_custom_call.1} parent=1 // pred_fallthru
      _
    // Predicated region
    $region42: #{tpu_custom_call.1} parent=1 // pred_check
      _
    $region43: #{tpu_custom_call.1} parent=1 // pred_check_branch
      %78 = sbr.rel (0) target = $region45
    $region44: #{tpu_custom_call.1} parent=1 // pred_region
      %79 = dma.done [#allocation9], 2048
    $region45: #{tpu_custom_call.1} parent=1 // pred_fallthru
      _
    %v80 = vld [vmem:[#allocation2] sm:$0xff]
    %v81 = vld [vmem:[#allocation5] sm:$0xff]
    %v82 = vld [vmem:[#allocation5 + $0x8] sm:$0xff]
    %v83 = vld [vmem:[%s2] sm:$0x1]
    %v85 = vlaneseq
    %v86 = vshrl.u32 %v85, 7
    %v87 = vsub.s32 0, %v86
    %v88 = vrot.slane %v83, %v87
    %vm90 = vcmask 130048
    %v92 = vsel %vm90, %v80, 0
    %94 = vmatprep.subr.mxu0 0.0
    %95 = vmatpush1.msra.mxu0 %v81
    %96 = vmatprep.subr.mxu0 0.0
    %97 = vmatpush1.msra.mxu0 %v82
    %98 = vmatprep.subr.mxu0 0.0
    %99 = vmatpush1.msra.mxu0 0.0
    %100 = vmatprep.subr.mxu0 0.0
    %101 = vmatpush1.msra.mxu0 0.0
    %102 = vmatprep.subr.mxu0 0.0
    %103 = vmatpush1.msra.mxu0 0.0
    %104 = vmatprep.subr.mxu0 0.0
    %105 = vmatpush1.msra.mxu0 0.0
    %106 = vmatprep.subr.mxu0 0.0
    %107 = vmatpush1.msra.mxu0 0.0
    %108 = vmatprep.subr.mxu0 0.0
    %109 = vmatpush1.msra.mxu0 0.0
    %110 = vmatprep.subr.mxu0 0.0
    %111 = vmatpush1.msra.mxu0 0.0
    %112 = vmatprep.subr.mxu0 0.0
    %113 = vmatpush1.msra.mxu0 0.0
    %114 = vmatprep.subr.mxu0 0.0
    %115 = vmatpush1.msra.mxu0 0.0
    %116 = vmatprep.subr.mxu0 0.0
    %117 = vmatpush1.msra.mxu0 0.0
    %118 = vmatprep.subr.mxu0 0.0
    %119 = vmatpush1.msra.mxu0 0.0
    %120 = vmatprep.subr.mxu0 0.0
    %121 = vmatpush1.msra.mxu0 0.0
    %122 = vmatprep.subr.mxu0 0.0
    %123 = vmatpush1.msra.mxu0 0.0
    %124 = vmatprep.subr.mxu0 0.0
    %125 = vmatpush1.msra.mxu0 0.0
    %126 = vmatprep.subr.mxu0 0.0
    %127 = vmatpush1.msra.mxu0 0.0
    %128 = vmatprep.subr.mxu0 0.0
    %129 = vmatpush1.msra.mxu0 0.0
    %130 = vmatprep.subr.mxu0 0.0
    %131 = vmatpush1.msra.mxu0 0.0
    %132 = vmatprep.subr.mxu0 0.0
    %133 = vmatpush1.msra.mxu0 0.0
    %134 = vmatprep.subr.mxu0 0.0
    %135 = vmatpush1.msra.mxu0 0.0
    %136 = vmatprep.subr.mxu0 0.0
    %137 = vmatpush1.msra.mxu0 0.0
    %138 = vmatprep.subr.mxu0 0.0
    %139 = vmatpush1.msra.mxu0 0.0
    %140 = vmatprep.subr.mxu0 0.0
    %141 = vmatpush1.msra.mxu0 0.0
    %142 = vmatprep.subr.mxu0 0.0
    %143 = vmatpush1.msra.mxu0 0.0
    %144 = vmatprep.subr.mxu0 0.0
    %145 = vmatpush1.msra.mxu0 0.0
    %146 = vmatprep.subr.mxu0 0.0
    %147 = vmatpush1.msra.mxu0 0.0
    %148 = vmatprep.subr.mxu0 0.0
    %149 = vmatpush1.msra.mxu0 0.0
    %150 = vmatprep.subr.mxu0 0.0
    %151 = vmatpush1.msra.mxu0 0.0
    %152 = vmatprep.subr.mxu0 0.0
    %153 = vmatpush1.msra.mxu0 0.0
    %154 = vmatprep.subr.mxu0 0.0
    %155 = vmatpush1.msra.mxu0 0.0
    %156 = vmatprep.subr.mxu0 0.0
    %157 = vmatpush1.msra.mxu0 0.0
    %158 = vmatprep.mubr.f32.mxu0 0.0
    %159 = vmatmul.mubr.f32.gmra.mrb[0].mxu0 %v92
    %v160 = vpop.f32.mrb[0].mxu0
    %v161 = vadd.f32 %v88, %v160
    %v162 = vpop.f32.mrb[0].mxu0
    %163 = vdwg.mxu0
    %v164 = vmax.f32 %v161, 0.0
    %v165 = vld [vmem:[#allocation7] sm:$0xff]
    %v166 = vld [vmem:[#allocation7 + $0x8] sm:$0xff]
    %v167 = vld [vmem:[#allocation7 + $0x10] sm:$0xff]
    %v168 = vld [vmem:[#allocation7 + $0x18] sm:$0xff]
    %v169 = vld [vmem:[#allocation7 + $0x20] sm:$0xff]
    %v170 = vld [vmem:[#allocation7 + $0x28] sm:$0xff]
    %v171 = vld [vmem:[#allocation7 + $0x30] sm:$0xff]
    %v172 = vld [vmem:[#allocation7 + $0x38] sm:$0xff]
    %v173 = vld [vmem:[#allocation7 + $0x40] sm:$0xff]
    %v174 = vld [vmem:[#allocation7 + $0x48] sm:$0xff]
    %v175 = vld [vmem:[#allocation7 + $0x50] sm:$0xff]
    %v176 = vld [vmem:[#allocation7 + $0x58] sm:$0xff]
    %v177 = vld [vmem:[#allocation7 + $0x60] sm:$0xff]
    %v178 = vld [vmem:[#allocation7 + $0x68] sm:$0xff]
    %v179 = vld [vmem:[#allocation7 + $0x70] sm:$0xff]
    %v180 = vld [vmem:[#allocation7 + $0x78] sm:$0xff]
    %v181 = vld [vmem:[%s4] sm:$0x1]
    %v183 = vlaneseq
    %v184 = vshrl.u32 %v183, 7
    %v185 = vsub.s32 0, %v184
    %v186 = vrot.slane %v181, %v185
    %188 = vmatprep.subr.mxu0 0.0
    %189 = vmatpush1.msra.mxu0 %v165
    %190 = vmatprep.subr.mxu0 0.0
    %191 = vmatpush1.msra.mxu0 %v166
    %192 = vmatprep.subr.mxu0 0.0
    %193 = vmatpush1.msra.mxu0 %v167
    %194 = vmatprep.subr.mxu0 0.0
    %195 = vmatpush1.msra.mxu0 %v168
    %196 = vmatprep.subr.mxu0 0.0
    %197 = vmatpush1.msra.mxu0 %v169
    %198 = vmatprep.subr.mxu0 0.0
    %199 = vmatpush1.msra.mxu0 %v170
    %200 = vmatprep.subr.mxu0 0.0
    %201 = vmatpush1.msra.mxu0 %v171
    %202 = vmatprep.subr.mxu0 0.0
    %203 = vmatpush1.msra.mxu0 %v172
    %204 = vmatprep.subr.mxu0 0.0
    %205 = vmatpush1.msra.mxu0 %v173
    %206 = vmatprep.subr.mxu0 0.0
    %207 = vmatpush1.msra.mxu0 %v174
    %208 = vmatprep.subr.mxu0 0.0
    %209 = vmatpush1.msra.mxu0 %v175
    %210 = vmatprep.subr.mxu0 0.0
    %211 = vmatpush1.msra.mxu0 %v176
    %212 = vmatprep.subr.mxu0 0.0
    %213 = vmatpush1.msra.mxu0 %v177
    %214 = vmatprep.subr.mxu0 0.0
    %215 = vmatpush1.msra.mxu0 %v178
    %216 = vmatprep.subr.mxu0 0.0
    %217 = vmatpush1.msra.mxu0 %v179
    %218 = vmatprep.subr.mxu0 0.0
    %219 = vmatpush1.msra.mxu0 %v180
    %220 = vmatprep.subr.mxu0 0.0
    %221 = vmatpush1.msra.mxu0 0.0
    %222 = vmatprep.subr.mxu0 0.0
    %223 = vmatpush1.msra.mxu0 0.0
    %224 = vmatprep.subr.mxu0 0.0
    %225 = vmatpush1.msra.mxu0 0.0
    %226 = vmatprep.subr.mxu0 0.0
    %227 = vmatpush1.msra.mxu0 0.0
    %228 = vmatprep.subr.mxu0 0.0
    %229 = vmatpush1.msra.mxu0 0.0
    %230 = vmatprep.subr.mxu0 0.0
    %231 = vmatpush1.msra.mxu0 0.0
    %232 = vmatprep.subr.mxu0 0.0
    %233 = vmatpush1.msra.mxu0 0.0
    %234 = vmatprep.subr.mxu0 0.0
    %235 = vmatpush1.msra.mxu0 0.0
    %236 = vmatprep.subr.mxu0 0.0
    %237 = vmatpush1.msra.mxu0 0.0
    %238 = vmatprep.subr.mxu0 0.0
    %239 = vmatpush1.msra.mxu0 0.0
    %240 = vmatprep.subr.mxu0 0.0
    %241 = vmatpush1.msra.mxu0 0.0
    %242 = vmatprep.subr.mxu0 0.0
    %243 = vmatpush1.msra.mxu0 0.0
    %244 = vmatprep.subr.mxu0 0.0
    %245 = vmatpush1.msra.mxu0 0.0
    %246 = vmatprep.subr.mxu0 0.0
    %247 = vmatpush1.msra.mxu0 0.0
    %248 = vmatprep.subr.mxu0 0.0
    %249 = vmatpush1.msra.mxu0 0.0
    %250 = vmatprep.subr.mxu0 0.0
    %251 = vmatpush1.msra.mxu0 0.0
    %252 = vmatprep.mubr.f32.mxu0 0.0
    %253 = vmatmul.mubr.f32.gmra.mrb[0].mxu0 %v164
    %v254 = vpop.f32.mrb[0].mxu0
    %v255 = vadd.f32 %v186, %v254
    %v256 = vpop.f32.mrb[0].mxu0
    %257 = vdwg.mxu0
    %v258 = vmax.f32 %v255, 0.0
    %v259 = vld [vmem:[#allocation8] sm:$0xff]
    %v260 = vld [vmem:[#allocation8 + $0x8] sm:$0xff]
    %v261 = vld [vmem:[#allocation8 + $0x10] sm:$0xff]
    %v262 = vld [vmem:[#allocation8 + $0x18] sm:$0xff]
    %v263 = vld [vmem:[#allocation8 + $0x20] sm:$0xff]
    %v264 = vld [vmem:[#allocation8 + $0x28] sm:$0xff]
    %v265 = vld [vmem:[#allocation8 + $0x30] sm:$0xff]
    %v266 = vld [vmem:[#allocation8 + $0x38] sm:$0xff]
    %v267 = vld [vmem:[#allocation8 + $0x40] sm:$0xff]
    %v268 = vld [vmem:[#allocation8 + $0x48] sm:$0xff]
    %v269 = vld [vmem:[#allocation8 + $0x50] sm:$0xff]
    %v270 = vld [vmem:[#allocation8 + $0x58] sm:$0xff]
    %v271 = vld [vmem:[#allocation8 + $0x60] sm:$0xff]
    %v272 = vld [vmem:[#allocation8 + $0x68] sm:$0xff]
    %v273 = vld [vmem:[#allocation8 + $0x70] sm:$0xff]
    %v274 = vld [vmem:[#allocation8 + $0x78] sm:$0xff]
    %v275 = vld [vmem:[%s6] sm:$0x1]
    %v277 = vlaneseq
    %v278 = vshrl.u32 %v277, 7
    %v279 = vsub.s32 0, %v278
    %v280 = vrot.slane %v275, %v279
    %282 = vmatprep.subr.mxu0 0.0
    %283 = vmatpush1.msra.mxu0 %v259
    %284 = vmatprep.subr.mxu0 0.0
    %285 = vmatpush1.msra.mxu0 %v260
    %286 = vmatprep.subr.mxu0 0.0
    %287 = vmatpush1.msra.mxu0 %v261
    %288 = vmatprep.subr.mxu0 0.0
    %289 = vmatpush1.msra.mxu0 %v262
    %290 = vmatprep.subr.mxu0 0.0
    %291 = vmatpush1.msra.mxu0 %v263
    %292 = vmatprep.subr.mxu0 0.0
    %293 = vmatpush1.msra.mxu0 %v264
    %294 = vmatprep.subr.mxu0 0.0
    %295 = vmatpush1.msra.mxu0 %v265
    %296 = vmatprep.subr.mxu0 0.0
    %297 = vmatpush1.msra.mxu0 %v266
    %298 = vmatprep.subr.mxu0 0.0
    %299 = vmatpush1.msra.mxu0 %v267
    %300 = vmatprep.subr.mxu0 0.0
    %301 = vmatpush1.msra.mxu0 %v268
    %302 = vmatprep.subr.mxu0 0.0
    %303 = vmatpush1.msra.mxu0 %v269
    %304 = vmatprep.subr.mxu0 0.0
    %305 = vmatpush1.msra.mxu0 %v270
    %306 = vmatprep.subr.mxu0 0.0
    %307 = vmatpush1.msra.mxu0 %v271
    %308 = vmatprep.subr.mxu0 0.0
    %309 = vmatpush1.msra.mxu0 %v272
    %310 = vmatprep.subr.mxu0 0.0
    %311 = vmatpush1.msra.mxu0 %v273
    %312 = vmatprep.subr.mxu0 0.0
    %313 = vmatpush1.msra.mxu0 %v274
    %314 = vmatprep.subr.mxu0 0.0
    %315 = vmatpush1.msra.mxu0 0.0
    %316 = vmatprep.subr.mxu0 0.0
    %317 = vmatpush1.msra.mxu0 0.0
    %318 = vmatprep.subr.mxu0 0.0
    %319 = vmatpush1.msra.mxu0 0.0
    %320 = vmatprep.subr.mxu0 0.0
    %321 = vmatpush1.msra.mxu0 0.0
    %322 = vmatprep.subr.mxu0 0.0
    %323 = vmatpush1.msra.mxu0 0.0
    %324 = vmatprep.subr.mxu0 0.0
    %325 = vmatpush1.msra.mxu0 0.0
    %326 = vmatprep.subr.mxu0 0.0
    %327 = vmatpush1.msra.mxu0 0.0
    %328 = vmatprep.subr.mxu0 0.0
    %329 = vmatpush1.msra.mxu0 0.0
    %330 = vmatprep.subr.mxu0 0.0
    %331 = vmatpush1.msra.mxu0 0.0
    %332 = vmatprep.subr.mxu0 0.0
    %333 = vmatpush1.msra.mxu0 0.0
    %334 = vmatprep.subr.mxu0 0.0
    %335 = vmatpush1.msra.mxu0 0.0
    %336 = vmatprep.subr.mxu0 0.0
    %337 = vmatpush1.msra.mxu0 0.0
    %338 = vmatprep.subr.mxu0 0.0
    %339 = vmatpush1.msra.mxu0 0.0
    %340 = vmatprep.subr.mxu0 0.0
    %341 = vmatpush1.msra.mxu0 0.0
    %342 = vmatprep.subr.mxu0 0.0
    %343 = vmatpush1.msra.mxu0 0.0
    %344 = vmatprep.subr.mxu0 0.0
    %345 = vmatpush1.msra.mxu0 0.0
    %346 = vmatprep.mubr.f32.mxu0 0.0
    %347 = vmatmul.mubr.f32.gmra.mrb[0].mxu0 %v258
    %v348 = vpop.f32.mrb[0].mxu0
    %v349 = vadd.f32 %v280, %v348
    %v350 = vpop.f32.mrb[0].mxu0
    %351 = vdwg.mxu0
    %352 = vst [vmem:[#allocation10] sm:$0xff] %v349
    // Predicated region
    $region46: #{tpu_custom_call.1} parent=1 // pred_check
      _
    $region47: #{tpu_custom_call.1} parent=1 // pred_check_branch
      %354 = sbr.rel (0) target = $region49
    $region48: #{tpu_custom_call.1} parent=1 // pred_region
      %s356 = ssub.s32 128, 128
      %357 = vsyncadd [#allocation4], %s356
      %s359 = sshll.u32 [#allocation10], 4
      %s360 = int_to_ptr.vmem [resolvable:$true] %s359
      %362 = dma.vmem_to_hbm [thread:$0]  %s360, 128, %s7, [#allocation4]
    $region49: #{tpu_custom_call.1} parent=1 // pred_fallthru
      _
    // Predicated region
    $region50: #{tpu_custom_call.1} parent=1 // pred_check
      _
    $region51: #{tpu_custom_call.1} parent=1 // pred_check_branch
      %364 = sbr.rel (0) target = $region53
    $region52: #{tpu_custom_call.1} parent=1 // pred_region
      %365 = dma.done [#allocation4], 128
    $region53: #{tpu_custom_call.1} parent=1 // pred_fallthru
      _
    %366 = vsyncpa [#allocation3], 1
    %367 = vsyncpa [#allocation6], 1
    %368 = vsyncpa [#allocation9], 1
    %369 = vsyncpa [#allocation4], 1

</llo_original>
